<compile_context>
chip_gen: v7x
topology: tpu7x:2x2x1
jax: 0.10.0
libtpu: 0.0.40
codegen_flags: <defaults>
</compile_context>

<pallas_src>
import numpy as np
import jax
import jax.numpy as jnp
from jax.experimental import pallas as pl
from jax.experimental.pallas import tpu as pltpu


# ---------------------------------------------------------------------------
# Pallas kernel: single GEMM (im2col'd 3x3 conv) + fused bias + LeakyReLU
# ---------------------------------------------------------------------------
def _make_kernel(negative_slope):
    def kernel(p_ref, w_ref, b_ref, o_ref):
        # p_ref: (rows_tile, p*K_pad)    im2col patches, p output rows fused
        # w_ref: (p*K_pad, p*C_out)      block-diagonal packed conv weights
        # b_ref: (1, p*C_out)            f32 bias, tiled p times
        # o_ref: (rows_tile, p*C_out)    lane-dense output tile
        acc = jnp.dot(p_ref[...], w_ref[...],
                      preferred_element_type=jnp.float32)
        y = acc + b_ref[...]
        y = jnp.where(y >= 0, y, negative_slope * y)      # LeakyReLU, any slope
        o_ref[...] = y.astype(o_ref.dtype)
    return kernel


def _pick_row_tile(total_rows, target):
    """Largest divisor of total_rows that is <= target and sublane-aligned."""
    if total_rows <= target:
        return total_rows
    for t in range(target, 0, -1):
        if total_rows % t == 0 and t % 8 == 0:
            return t
    return total_rows


# ---------------------------------------------------------------------------
# Wrapper: layout plumbing (im2col, K padding, lane packing) + pallas_call
# ---------------------------------------------------------------------------
def input_proj(x, weight, bias, *, stride=1, negative_slope=0.01,
               target_rows_per_tile=2048):
    """Forward pass of InputProj.

    x      : (B, C_in, H, W)      NCHW, like the PyTorch module input
    weight : (C_out, C_in, 3, 3)  PyTorch Conv2d weight layout
    bias   : (C_out,)
    returns: (B, H_out*W_out, C_out) == act(conv(x)).flatten(2).transpose(1, 2)
    """
    B, C_in, H, W = x.shape
    C_out, C_in_w, kh, kw = weight.shape
    assert (kh, kw) == (3, 3) and C_in_w == C_in
    pad = kh // 2  # padding = kernel_size // 2 in the module

    H_out = (H + 2 * pad - kh) // stride + 1
    W_out = (W + 2 * pad - kw) // stride + 1
    n_rows = H_out * W_out

    # ---- wrapper-side im2col (XLA layout plumbing, done once) ------------
    # Feature ordering: (ky, kx, c_in); matched by the weight reshape below.
    x_nhwc = jnp.transpose(x, (0, 2, 3, 1))
    x_p = jnp.pad(x_nhwc, ((0, 0), (pad, pad), (pad, pad), (0, 0)))
    taps = []
    for dy in range(kh):
        for dx in range(kw):
            taps.append(
                x_p[:, dy:dy + stride * (H_out - 1) + 1:stride,
                       dx:dx + stride * (W_out - 1) + 1:stride, :])
    patches = jnp.concatenate(taps, axis=-1)          # (B, H_out, W_out, 9*C_in)

    K = kh * kw * C_in
    K_pad = -(-K // 8) * 8                            # 27 -> 32 (sublane align)
    patches = jnp.pad(patches, ((0, 0), (0, 0), (0, 0), (0, K_pad - K)))
    patches = patches.reshape(B, n_rows, K_pad).astype(x.dtype)

    w_flat = jnp.transpose(weight, (2, 3, 1, 0)).reshape(K, C_out)
    w_flat = jnp.pad(w_flat, ((0, K_pad - K), (0, 0))).astype(x.dtype)

    # ---- lane-dense output packing ----------------------------------------
    # Fuse p consecutive output rows so the store lane width is p*C_out = 128
    # (unmasked vst) whenever C_out divides 128.
    if C_out < 128 and 128 % C_out == 0 and n_rows % (128 // C_out) == 0:
        p = 128 // C_out
    else:
        p = 1
    rows_packed = n_rows // p
    patches = patches.reshape(B, rows_packed, p * K_pad)   # contiguous reshape

    w_bd = jnp.zeros((p * K_pad, p * C_out), dtype=x.dtype)
    for i in range(p):
        w_bd = w_bd.at[i * K_pad:(i + 1) * K_pad,
                       i * C_out:(i + 1) * C_out].set(w_flat)
    b_packed = jnp.tile(bias.astype(jnp.float32), p).reshape(1, p * C_out)

    # ---- grid / tiling ----------------------------------------------------
    rows_tile = _pick_row_tile(rows_packed, target_rows_per_tile)
    grid = (B, rows_packed // rows_tile)

    kernel = _make_kernel(negative_slope)
    out = pl.pallas_call(
        kernel,
        out_shape=jax.ShapeDtypeStruct((B, rows_packed, p * C_out), x.dtype),
        grid_spec=pltpu.PrefetchScalarGridSpec(
            num_scalar_prefetch=0,
            grid=grid,
            in_specs=[
                # patches: batch dim squeezed, row-tiled, full K in lanes
                pl.BlockSpec((None, rows_tile, p * K_pad),
                             lambda b, r: (b, r, 0)),
                # packed weights: constant index_map -> stays resident
                pl.BlockSpec((p * K_pad, p * C_out), lambda b, r: (0, 0)),
                # packed f32 bias: constant index_map -> stays resident
                pl.BlockSpec((1, p * C_out), lambda b, r: (0, 0)),
            ],
            out_specs=pl.BlockSpec((None, rows_tile, p * C_out),
                                   lambda b, r: (b, r, 0)),
        ),
        compiler_params=pltpu.CompilerParams(
            dimension_semantics=("parallel", "parallel")),
    )(patches, w_bd, b_packed)

    # Free contiguous reshape back to (B, H_out*W_out, C_out).
    return out.reshape(B, n_rows, C_out)


# ---------------------------------------------------------------------------
# Pure-JAX reference (mirrors the PyTorch forward exactly)
# ---------------------------------------------------------------------------
def reference(x, weight, bias, stride=1, negative_slope=0.01):
    y = jax.lax.conv_general_dilated(
        x, weight, window_strides=(stride, stride), padding=((1, 1), (1, 1)),
        dimension_numbers=('NCHW', 'OIHW', 'NCHW'))
    y = y + bias[None, :, None, None]
    y = jnp.where(y >= 0, y, negative_slope * y)          # LeakyReLU
    B, C_out, H, W = y.shape
    return jnp.transpose(y.reshape(B, C_out, H * W), (0, 2, 1))


# ---------------------------------------------------------------------------
if __name__ == "__main__":
    # Module defaults: in_channel=3, out_channel=64, kernel=3; batch=2, 16x16.
    B, C_in, H, W = 2, 3, 16, 16
    C_out = 64

    key = jax.random.PRNGKey(0)
    kx, kw_, kb = jax.random.split(key, 3)
    x = jax.random.normal(kx, (B, C_in, H, W), jnp.float32)
    weight = jax.random.normal(kw_, (C_out, C_in, 3, 3), jnp.float32) * 0.1
    bias = jax.random.normal(kb, (C_out,), jnp.float32) * 0.1

    # stride=1 (module default)
    out = jax.block_until_ready(input_proj(x, weight, bias))
    ref = reference(x, weight, bias)
    np.testing.assert_allclose(np.asarray(out), np.asarray(ref),
                               rtol=1e-4, atol=1e-4)

    # stride=2 (module also allows non-unit stride)
    out2 = jax.block_until_ready(input_proj(x, weight, bias, stride=2))
    ref2 = reference(x, weight, bias, stride=2)
    np.testing.assert_allclose(np.asarray(out2), np.asarray(ref2),
                               rtol=1e-4, atol=1e-4)

    print("KERNEL_OK")
</pallas_src>

<mosaic_0001>
module attributes {stable_mosaic.version = 11 : i64} {
  func.func @kernel(%arg0: i32, %arg1: i32, %arg2: memref<1x128x64xf32, #tpu.memory_space<vmem>>, %arg3: memref<64x128xf32, #tpu.memory_space<vmem>>, %arg4: memref<1x128xf32, #tpu.memory_space<vmem>>, %arg5: memref<1x128x128xf32, #tpu.memory_space<vmem>>) attributes {dimension_semantics = [#tpu.dimension_semantics<parallel>, #tpu.dimension_semantics<parallel>], iteration_bounds = array<i64: 2, 1>, scalar_prefetch = 0 : i64, scratch_operands = 0 : i64, tpu.core_type = #tpu.core_type<tc>, window_params = [{transform_indices = @transform_0, window_bounds = array<i64: 1, 128, 64>}, {pipeline_mode = #tpu.pipeline_mode<synchronous>, transform_indices = @transform_1, window_bounds = array<i64: 64, 128>}, {pipeline_mode = #tpu.pipeline_mode<synchronous>, transform_indices = @transform_2, window_bounds = array<i64: 1, 128>}, {transform_indices = @transform_3, window_bounds = array<i64: 1, 128, 128>}]} {
    %c0 = arith.constant 0 : index
    %c0_0 = arith.constant 0 : index
    %c0_1 = arith.constant 0 : index
    %0 = vector.load %arg2[%c0, %c0_0, %c0_1] : memref<1x128x64xf32, #tpu.memory_space<vmem>>, vector<1x128x64xf32>
    %1 = vector.shape_cast %0 : vector<1x128x64xf32> to vector<128x64xf32>
    %c0_2 = arith.constant 0 : index
    %c0_3 = arith.constant 0 : index
    %2 = vector.load %arg3[%c0_2, %c0_3] : memref<64x128xf32, #tpu.memory_space<vmem>>, vector<64x128xf32>
    %cst = arith.constant dense<0.000000e+00> : vector<128x128xf32>
    %3 = tpu.matmul %1, %2, %cst {dimension_numbers = #tpu.dot_dimension_numbers<[1], [0], [0], [1], [0, 0, 1, 1], [], []>} : vector<128x64xf32>, vector<64x128xf32>, vector<128x128xf32> -> vector<128x128xf32>
    %c0_4 = arith.constant 0 : index
    %c0_5 = arith.constant 0 : index
    %4 = vector.load %arg4[%c0_4, %c0_5] : memref<1x128xf32, #tpu.memory_space<vmem>>, vector<1x128xf32>
    %5 = vector.broadcast %4 : vector<1x128xf32> to vector<128x128xf32>
    %6 = arith.addf %3, %5 : vector<128x128xf32>
    %cst_6 = arith.constant 0.000000e+00 : f32
    %7 = vector.broadcast %cst_6 : f32 to vector<128x128xf32>
    %8 = arith.cmpf oge, %6, %7 : vector<128x128xf32>
    %cst_7 = arith.constant 0.00999999977 : f32
    %9 = vector.broadcast %cst_7 : f32 to vector<128x128xf32>
    %10 = arith.mulf %9, %6 : vector<128x128xf32>
    %11 = arith.select %8, %6, %10 : vector<128x128xi1>, vector<128x128xf32>
    %c0_8 = arith.constant 0 : index
    %c0_9 = arith.constant 0 : index
    %c0_10 = arith.constant 0 : index
    %12 = vector.load %arg5[%c0_8, %c0_9, %c0_10] : memref<1x128x128xf32, #tpu.memory_space<vmem>>, vector<1x128x128xf32>
    %13 = vector.shape_cast %12 : vector<1x128x128xf32> to vector<128x128xf32>
    %14 = vector.shape_cast %11 : vector<128x128xf32> to vector<1x128x128xf32>
    tpu.vector_store %arg5[%c0_8, %c0_9, %c0_10], %14 {strides = array<i32>} : memref<1x128x128xf32, #tpu.memory_space<vmem>>, vector<1x128x128xf32>,
    return
  }
  func.func @transform_0(%arg0: i32, %arg1: i32) -> (i32, i32, i32) {
    %c0_i32 = arith.constant 0 : i32
    %c0_i32_0 = arith.constant 0 : i32
    return %arg0, %arg1, %c0_i32 : i32, i32, i32
  }
  func.func @transform_1(%arg0: i32, %arg1: i32) -> (i32, i32) {
    %c0_i32 = arith.constant 0 : i32
    %c0_i32_0 = arith.constant 0 : i32
    %c0_i32_1 = arith.constant 0 : i32
    return %c0_i32, %c0_i32_0 : i32, i32
  }
  func.func @transform_2(%arg0: i32, %arg1: i32) -> (i32, i32) {
    %c0_i32 = arith.constant 0 : i32
    %c0_i32_0 = arith.constant 0 : i32
    %c0_i32_1 = arith.constant 0 : i32
    return %c0_i32, %c0_i32_0 : i32, i32
  }
  func.func @transform_3(%arg0: i32, %arg1: i32) -> (i32, i32, i32) {
    %c0_i32 = arith.constant 0 : i32
    %c0_i32_0 = arith.constant 0 : i32
    return %arg0, %arg1, %c0_i32 : i32, i32, i32
  }
}

</mosaic_0001>

<llo_original>
// kernel: tpu_custom_call.1
$region0: #{tpu_custom_call.1}
  #allocation0 [shape = 'u32[]', space=smem, size = 0x4, offset = 0x4, fixed_abs, tag = 'smem constant byte address 0x4 - core index']
  #allocation1 [shape = 'u32[144,128]{1,0:T(1,128)}', space=vmem, size = 0x12000, scoped, tag = 'internal scratch']
  %s0 = inlined_call_operand.vmem [shape: f32[2,128,64], index: 0, kind: input, shape index: {}]
  %s1 = inlined_call_operand.vmem [shape: f32[64,128], index: 1, kind: input, shape index: {}]
  %s2 = inlined_call_operand.vmem [shape: f32[1,128], index: 2, kind: input, shape index: {}]
  %s3 = inlined_call_operand.hbm [shape: f32[2,128,128], index: 3, kind: output, shape index: {}]
  %s4 = sld [smem:[#allocation0]]
  $region45: #{tpu_custom_call.1} parent=0
    _
  %s6 = ssub.s32 1, %s4
  %s7 = scalar_select 0, %s6, %s4
  $region1: #{tpu_custom_call.1} parent=0
    #allocation2 [shape = 'u8[131072]{0}', space=vmem, size = 0x20000, scoped, tag = 'output window, operand 0']
    #allocation3 [shape = 's32[2]{0}', space=sflag, size = 0x8, scoped, tag = 'scoped memory for tpu_custom_call.1']
    %8 = vsyncpa [#allocation3], 0
    %s9 = scalar_lea.sflag [#allocation3], 1
    %10 = vsyncpa %s9, 0
    loop: start=0, step=1, limit=4
    $region2: #{tpu_custom_call.1} parent=1 // loop_pre_header
      _
    $region3: #{tpu_custom_call.1} parent=1 // loop_header
      %s12 = sphi 0, %s16
      %p13 = scmp.ge.s32.totalorder %s12, 4
      %s19 = sphi 0, %s31
      %s20 = sphi 0, %s27
      %s21 = sphi 0, %s19
      %s22 = sphi 0, %s20
      %s23 = sphi 0, %s21
      %s24 = sphi 0, %s22
      %s36 = sphi 0, %s38
      %s39 = sphi 0, %s36
      %s40 = sphi 0, %s39
      %s56 = sphi 0, %s40
      %s60 = sphi 0, %s60
      %s62 = sphi 0, %s60
      %s63 = sphi 0, %s62
      %s77 = sphi 0, %s63
      %s81 = sphi 0, %s81
      %s83 = sphi 0, %s81
      %s84 = sphi 0, %s83
      %s98 = sphi 0, %s84
      %s106 = sphi 0, %s108
      %s109 = sphi 0, %s106
      %s110 = sphi 0, %s109
      %s126 = sphi 0, %s110
    $region4: #{tpu_custom_call.1} parent=1 // loop_header_branch
      %15 = sbr.rel (%p13) target = $region8
    $region5: #{tpu_custom_call.1} parent=1 // loop_body
      %s17 = ssub.s32 %s12, 1
      %s18 = ssub.s32 %s12, 2
      %s25 = sadd.s32 1, %s20
      %p26 = scmp.ge.s32.totalorder %s25, 1
      %s27 = scalar_select %p26, 0, %s25
      %s28 = sadd.s32 1, %s19
      %s29 = scalar_select %p26, %s28, %s19
      %p30 = scmp.ge.s32.totalorder %s29, 2
      %s31 = scalar_select %p30, 0, %s29
      %s32 = ssub.s32 %s19, %s31
      %s33 = ssub.s32 %s20, %s27
      %s34 = sor.u32 %s32, %s33
      %p35 = scmp.eq.s32.totalorder %s34, 0
      %s37 = sadd.s32 %s36, 1
      %s38 = scalar_select %p35, %s36, %s37
      %p41 = pneg %p35
      %p42 = scmp.eq.s32.totalorder %s12, 1
      %p43 = por %p41, %p42
      %p44 = scmp.ne.s32.totalorder %s36, %s39
      %p45 = scmp.eq.s32.totalorder %s12, 0
      %p46 = por %p44, %p45
      %p47 = scmp.ne.s32.totalorder %s36, %s39
      %p48 = scmp.eq.s32.totalorder %s17, 1
      %p49 = por %p47, %p48
      %p50 = scmp.ne.s32.totalorder %s39, %s40
      %p51 = scmp.eq.s32.totalorder %s17, 0
      %p52 = por %p50, %p51
      %p53 = scmp.ne.s32.totalorder %s39, %s40
      %p54 = scmp.eq.s32.totalorder %s18, 1
      %p55 = por %p53, %p54
      %p57 = scmp.ne.s32.totalorder %s40, %s56
      %p58 = scmp.eq.s32.totalorder %s18, 0
      %p59 = por %p57, %p58
      %s61 = sadd.s32 %s60, 1
      %p64 = scmp.eq.s32.totalorder %s12, 1
      %p65 = scmp.ne.s32.totalorder %s60, %s62
      %p66 = scmp.eq.s32.totalorder %s12, 0
      %p67 = por %p65, %p66
      %p68 = scmp.ne.s32.totalorder %s60, %s62
      %p69 = scmp.eq.s32.totalorder %s17, 1
      %p70 = por %p68, %p69
      %p71 = scmp.ne.s32.totalorder %s62, %s63
      %p72 = scmp.eq.s32.totalorder %s17, 0
      %p73 = por %p71, %p72
      %p74 = scmp.ne.s32.totalorder %s62, %s63
      %p75 = scmp.eq.s32.totalorder %s18, 1
      %p76 = por %p74, %p75
      %p78 = scmp.ne.s32.totalorder %s63, %s77
      %p79 = scmp.eq.s32.totalorder %s18, 0
      %p80 = por %p78, %p79
      %s82 = sadd.s32 %s81, 1
      %p85 = scmp.eq.s32.totalorder %s12, 1
      %p86 = scmp.ne.s32.totalorder %s81, %s83
      %p87 = scmp.eq.s32.totalorder %s12, 0
      %p88 = por %p86, %p87
      %p89 = scmp.ne.s32.totalorder %s81, %s83
      %p90 = scmp.eq.s32.totalorder %s17, 1
      %p91 = por %p89, %p90
      %p92 = scmp.ne.s32.totalorder %s83, %s84
      %p93 = scmp.eq.s32.totalorder %s17, 0
      %p94 = por %p92, %p93
      %p95 = scmp.ne.s32.totalorder %s83, %s84
      %p96 = scmp.eq.s32.totalorder %s18, 1
      %p97 = por %p95, %p96
      %p99 = scmp.ne.s32.totalorder %s84, %s98
      %p100 = scmp.eq.s32.totalorder %s18, 0
      %p101 = por %p99, %p100
      %s102 = ssub.s32 %s19, %s31
      %s103 = ssub.s32 %s20, %s27
      %s104 = sor.u32 %s102, %s103
      %p105 = scmp.eq.s32.totalorder %s104, 0
      %s107 = sadd.s32 %s106, 1
      %s108 = scalar_select %p105, %s106, %s107
      %p111 = pneg %p105
      %p112 = scmp.eq.s32.totalorder %s12, 1
      %p113 = por %p111, %p112
      %p114 = scmp.ne.s32.totalorder %s106, %s109
      %p115 = scmp.eq.s32.totalorder %s12, 0
      %p116 = por %p114, %p115
      %p117 = scmp.ne.s32.totalorder %s106, %s109
      %p118 = scmp.eq.s32.totalorder %s17, 1
      %p119 = por %p117, %p118
      %p120 = scmp.ne.s32.totalorder %s109, %s110
      %p121 = scmp.eq.s32.totalorder %s17, 0
      %p122 = por %p120, %p121
      %p123 = scmp.ne.s32.totalorder %s109, %s110
      %p124 = scmp.eq.s32.totalorder %s18, 1
      %p125 = por %p123, %p124
      %p127 = scmp.ne.s32.totalorder %s110, %s126
      %p128 = scmp.eq.s32.totalorder %s18, 0
      %p129 = por %p127, %p128
      %p130 = scmp.le.s32.totalorder 1, %s12
      %p131 = scmp.lt.s32.totalorder %s12, 3
      %p132 = pnand %p130, %p131
      %p133 = pneg %p132
      // Predicated region
      $region9: #{tpu_custom_call.1} parent=5 // pred_check
        _
      $region10: #{tpu_custom_call.1} parent=5 // pred_check_branch
        %135 = sbr.rel (%p132) target = $region12
      $region11: #{tpu_custom_call.1} parent=5 // pred_region
        %s136 = ssub.s32 %s12, 1
        // Predicated region
        $region13: #{tpu_custom_call.1} parent=11 // pred_check
          %p137 = pneg %p73
        $region14: #{tpu_custom_call.1} parent=11 // pred_check_branch
          %139 = sbr.rel (%p137) target = $region16
        $region15: #{tpu_custom_call.1} parent=11 // pred_region
          _
        $region16: #{tpu_custom_call.1} parent=11 // pred_fallthru
          _
        // Predicated region
        $region17: #{tpu_custom_call.1} parent=11 // pred_check
          %p140 = pneg %p94
        $region18: #{tpu_custom_call.1} parent=11 // pred_check_branch
          %142 = sbr.rel (%p140) target = $region20
        $region19: #{tpu_custom_call.1} parent=11 // pred_region
          _
        $region20: #{tpu_custom_call.1} parent=11 // pred_fallthru
          _
      $region12: #{tpu_custom_call.1} parent=5 // pred_fallthru
        _
      %p143 = scmp.lt.s32.totalorder %s12, 2
      // Predicated region
      $region21: #{tpu_custom_call.1} parent=5 // pred_check
        %p144 = pneg %p143
      $region22: #{tpu_custom_call.1} parent=5 // pred_check_branch
        %146 = sbr.rel (%p144) target = $region24
      $region23: #{tpu_custom_call.1} parent=5 // pred_region
        // Predicated region
        $region25: #{tpu_custom_call.1} parent=23 // pred_check
          %p147 = pneg %p46
        $region26: #{tpu_custom_call.1} parent=23 // pred_check_branch
          %149 = sbr.rel (%p147) target = $region28
        $region27: #{tpu_custom_call.1} parent=23 // pred_region
          %s150 = smul.u32 16, %s20
          %p151 = scmp.lt.s32.totalorder %s19, 1
          %s152 = scalar_select %p151, %s19, 1
          %p153 = scmp.lt.s32.totalorder %s150, 15
          %s154 = scalar_select %p153, %s150, 15
          %s155 = smul.addr %s152, 16
          %s156 = sadd.s32 %s154, %s155
          %s157 = smul.addr %s156, 8
          %s158 = scalar_lea.vmem %s0, %s157
          %s159 = smul.u32 16, %s20
        $region28: #{tpu_custom_call.1} parent=23 // pred_fallthru
          _
      $region24: #{tpu_custom_call.1} parent=5 // pred_fallthru
        _
      %p160 = scmp.le.s32.totalorder 1, %s12
      %p161 = scmp.lt.s32.totalorder %s12, 3
      %p162 = pnand %p160, %p161
      %p163 = pneg %p162
      // Predicated region
      $region29: #{tpu_custom_call.1} parent=5 // pred_check
        _
      $region30: #{tpu_custom_call.1} parent=5 // pred_check_branch
        %165 = sbr.rel (%p162) target = $region32
      $region31: #{tpu_custom_call.1} parent=5 // pred_region
        %s166 = ssub.s32 %s12, 1
        %s167 = smul.u32 16, %s22
        %p168 = scmp.lt.s32.totalorder %s21, 1
        %s169 = scalar_select %p168, %s21, 1
        %p170 = scmp.lt.s32.totalorder %s167, 15
        %s171 = scalar_select %p170, %s167, 15
        %s172 = smul.addr %s169, 16
        %s173 = sadd.s32 %s171, %s172
        %s174 = smul.addr %s173, 8
        %s175 = scalar_lea.vmem %s0, %s174
        %p176 = pneg %p52
        %p177 = pneg %p49
        %p178 = pneg %p73
        %p179 = pneg %p70
        %p180 = pneg %p94
        %p181 = pneg %p91
        %p182 = pneg %p122
        %p183 = pneg %p119
        %s184 = sand.u32 %s109, 1
        %s185 = scalar_lea.sflag [#allocation3], %s184
        %s186 = sand.u32 %s109, 1
        %s187 = smul.addr %s186, 128
        %s188 = scalar_lea.vmem [#allocation2], %s187
        %s189 = smul.u32 16, %s22
        %p190 = scmp.lt.s32.totalorder %s21, 1
        %s191 = scalar_select %p190, %s21, 1
        %p192 = scmp.lt.s32.totalorder %s189, 15
        %s193 = scalar_select %p192, %s189, 15
        %s194 = smul.addr %s191, 16
        %s195 = sadd.s32 %s193, %s194
        %s196 = smul.addr %s195, 8
        %s197 = scalar_lea.vmem %s0, %s196
        %s198 = smul.u32 16, %s22
        %s199 = smul.u32 16, %s22
        %v200 = vld [vmem:[%s197] sm:$0xff]
        %v201 = vld [vmem:[%s197 + $0x8] sm:$0xff]
        %v202 = vld [vmem:[%s197 + $0x10] sm:$0xff]
        %v203 = vld [vmem:[%s197 + $0x18] sm:$0xff]
        %v204 = vld [vmem:[%s197 + $0x20] sm:$0xff]
        %v205 = vld [vmem:[%s197 + $0x28] sm:$0xff]
        %v206 = vld [vmem:[%s197 + $0x30] sm:$0xff]
        %v207 = vld [vmem:[%s197 + $0x38] sm:$0xff]
        %v208 = vld [vmem:[%s197 + $0x40] sm:$0xff]
        %v209 = vld [vmem:[%s197 + $0x48] sm:$0xff]
        %v210 = vld [vmem:[%s197 + $0x50] sm:$0xff]
        %v211 = vld [vmem:[%s197 + $0x58] sm:$0xff]
        %v212 = vld [vmem:[%s197 + $0x60] sm:$0xff]
        %v213 = vld [vmem:[%s197 + $0x68] sm:$0xff]
        %v214 = vld [vmem:[%s197 + $0x70] sm:$0xff]
        %v215 = vld [vmem:[%s197 + $0x78] sm:$0xff]
        %v216 = vld [vmem:[%s1] sm:$0xff]
        %v217 = vld [vmem:[%s1 + $0x8] sm:$0xff]
        %v218 = vld [vmem:[%s1 + $0x10] sm:$0xff]
        %v219 = vld [vmem:[%s1 + $0x18] sm:$0xff]
        %v220 = vld [vmem:[%s1 + $0x20] sm:$0xff]
        %v221 = vld [vmem:[%s1 + $0x28] sm:$0xff]
        %v222 = vld [vmem:[%s1 + $0x30] sm:$0xff]
        %v223 = vld [vmem:[%s1 + $0x38] sm:$0xff]
        %v224 = vld [vmem:[%s2] sm:$0x1]
        %v226 = vlaneseq
        %v227 = vshrl.u32 %v226, 7
        %v228 = vsub.s32 0, %v227
        %v229 = vrot.slane %v224, %v228
        %vm231 = vcmask 523264
        %v233 = vsel %vm231, %v200, 0
        %v236 = vsel %vm231, %v201, 0
        %v239 = vsel %vm231, %v202, 0
        %v242 = vsel %vm231, %v203, 0
        %v245 = vsel %vm231, %v204, 0
        %v248 = vsel %vm231, %v205, 0
        %v251 = vsel %vm231, %v206, 0
        %v254 = vsel %vm231, %v207, 0
        %v257 = vsel %vm231, %v208, 0
        %v260 = vsel %vm231, %v209, 0
        %v263 = vsel %vm231, %v210, 0
        %v266 = vsel %vm231, %v211, 0
        %v269 = vsel %vm231, %v212, 0
        %v272 = vsel %vm231, %v213, 0
        %v275 = vsel %vm231, %v214, 0
        %v278 = vsel %vm231, %v215, 0
        %280 = vmatprep.subr.mxu0 0.0
        %281 = vmatpush1.msra.mxu0 %v216
        %282 = vmatprep.subr.mxu0 0.0
        %283 = vmatpush1.msra.mxu0 %v217
        %284 = vmatprep.subr.mxu0 0.0
        %285 = vmatpush1.msra.mxu0 %v218
        %286 = vmatprep.subr.mxu0 0.0
        %287 = vmatpush1.msra.mxu0 %v219
        %288 = vmatprep.subr.mxu0 0.0
        %289 = vmatpush1.msra.mxu0 %v220
        %290 = vmatprep.subr.mxu0 0.0
        %291 = vmatpush1.msra.mxu0 %v221
        %292 = vmatprep.subr.mxu0 0.0
        %293 = vmatpush1.msra.mxu0 %v222
        %294 = vmatprep.subr.mxu0 0.0
        %295 = vmatpush1.msra.mxu0 %v223
        %296 = vmatprep.subr.mxu0 0.0
        %297 = vmatpush1.msra.mxu0 0.0
        %298 = vmatprep.subr.mxu0 0.0
        %299 = vmatpush1.msra.mxu0 0.0
        %300 = vmatprep.subr.mxu0 0.0
        %301 = vmatpush1.msra.mxu0 0.0
        %302 = vmatprep.subr.mxu0 0.0
        %303 = vmatpush1.msra.mxu0 0.0
        %304 = vmatprep.subr.mxu0 0.0
        %305 = vmatpush1.msra.mxu0 0.0
        %306 = vmatprep.subr.mxu0 0.0
        %307 = vmatpush1.msra.mxu0 0.0
        %308 = vmatprep.subr.mxu0 0.0
        %309 = vmatpush1.msra.mxu0 0.0
        %310 = vmatprep.subr.mxu0 0.0
        %311 = vmatpush1.msra.mxu0 0.0
        %312 = vmatprep.subr.mxu0 0.0
        %313 = vmatpush1.msra.mxu0 0.0
        %314 = vmatprep.subr.mxu0 0.0
        %315 = vmatpush1.msra.mxu0 0.0
        %316 = vmatprep.subr.mxu0 0.0
        %317 = vmatpush1.msra.mxu0 0.0
        %318 = vmatprep.subr.mxu0 0.0
        %319 = vmatpush1.msra.mxu0 0.0
        %320 = vmatprep.subr.mxu0 0.0
        %321 = vmatpush1.msra.mxu0 0.0
        %322 = vmatprep.subr.mxu0 0.0
        %323 = vmatpush1.msra.mxu0 0.0
        %324 = vmatprep.subr.mxu0 0.0
        %325 = vmatpush1.msra.mxu0 0.0
        %326 = vmatprep.subr.mxu0 0.0
        %327 = vmatpush1.msra.mxu0 0.0
        %328 = vmatprep.subr.mxu0 0.0
        %329 = vmatpush1.msra.mxu0 0.0
        %330 = vmatprep.subr.mxu0 0.0
        %331 = vmatpush1.msra.mxu0 0.0
        %332 = vmatprep.subr.mxu0 0.0
        %333 = vmatpush1.msra.mxu0 0.0
        %334 = vmatprep.subr.mxu0 0.0
        %335 = vmatpush1.msra.mxu0 0.0
        %336 = vmatprep.subr.mxu0 0.0
        %337 = vmatpush1.msra.mxu0 0.0
        %338 = vmatprep.subr.mxu0 0.0
        %339 = vmatpush1.msra.mxu0 0.0
        %340 = vmatprep.subr.mxu0 0.0
        %341 = vmatpush1.msra.mxu0 0.0
        %342 = vmatprep.subr.mxu0 0.0
        %343 = vmatpush1.msra.mxu0 0.0
        %344 = vmatprep.mubr.f32.mxu0 0.0
        %345 = vmatmul.mubr.f32.gmra.mrb[0].mxu0 %v233
        %v346 = vpop.f32.mrb[0].mxu0
        %v347 = vadd.f32 %v229, %v346
        %v348 = vpop.f32.mrb[0].mxu0
        %349 = vmatprep.mubr.f32.mxu0 0.0
        %350 = vmatmul.mubr.f32.gmra.mrb[0].mxu0 %v236
        %v351 = vpop.f32.mrb[0].mxu0
        %v352 = vadd.f32 %v229, %v351
        %v353 = vpop.f32.mrb[0].mxu0
        %354 = vmatprep.mubr.f32.mxu0 0.0
        %355 = vmatmul.mubr.f32.gmra.mrb[0].mxu0 %v239
        %v356 = vpop.f32.mrb[0].mxu0
        %v357 = vadd.f32 %v229, %v356
        %v358 = vpop.f32.mrb[0].mxu0
        %359 = vmatprep.mubr.f32.mxu0 0.0
        %360 = vmatmul.mubr.f32.gmra.mrb[0].mxu0 %v242
        %v361 = vpop.f32.mrb[0].mxu0
        %v362 = vadd.f32 %v229, %v361
        %v363 = vpop.f32.mrb[0].mxu0
        %364 = vmatprep.mubr.f32.mxu0 0.0
        %365 = vmatmul.mubr.f32.gmra.mrb[0].mxu0 %v245
        %v366 = vpop.f32.mrb[0].mxu0
        %v367 = vadd.f32 %v229, %v366
        %v368 = vpop.f32.mrb[0].mxu0
        %369 = vmatprep.mubr.f32.mxu0 0.0
        %370 = vmatmul.mubr.f32.gmra.mrb[0].mxu0 %v248
        %v371 = vpop.f32.mrb[0].mxu0
        %v372 = vadd.f32 %v229, %v371
        %v373 = vpop.f32.mrb[0].mxu0
        %374 = vmatprep.mubr.f32.mxu0 0.0
        %375 = vmatmul.mubr.f32.gmra.mrb[0].mxu0 %v251
        %v376 = vpop.f32.mrb[0].mxu0
        %v377 = vadd.f32 %v229, %v376
        %v378 = vpop.f32.mrb[0].mxu0
        %379 = vmatprep.mubr.f32.mxu0 0.0
        %380 = vmatmul.mubr.f32.gmra.mrb[0].mxu0 %v254
        %v381 = vpop.f32.mrb[0].mxu0
        %v382 = vadd.f32 %v229, %v381
        %v383 = vpop.f32.mrb[0].mxu0
        %384 = vmatprep.mubr.f32.mxu0 0.0
        %385 = vmatmul.mubr.f32.gmra.mrb[0].mxu0 %v257
        %v386 = vpop.f32.mrb[0].mxu0
        %v387 = vadd.f32 %v229, %v386
        %v388 = vpop.f32.mrb[0].mxu0
        %389 = vmatprep.mubr.f32.mxu0 0.0
        %390 = vmatmul.mubr.f32.gmra.mrb[0].mxu0 %v260
        %v391 = vpop.f32.mrb[0].mxu0
        %v392 = vadd.f32 %v229, %v391
        %v393 = vpop.f32.mrb[0].mxu0
        %394 = vmatprep.mubr.f32.mxu0 0.0
        %395 = vmatmul.mubr.f32.gmra.mrb[0].mxu0 %v263
        %v396 = vpop.f32.mrb[0].mxu0
        %v397 = vadd.f32 %v229, %v396
        %v398 = vpop.f32.mrb[0].mxu0
        %399 = vmatprep.mubr.f32.mxu0 0.0
        %400 = vmatmul.mubr.f32.gmra.mrb[0].mxu0 %v266
        %v401 = vpop.f32.mrb[0].mxu0
        %v402 = vadd.f32 %v229, %v401
        %v403 = vpop.f32.mrb[0].mxu0
        %404 = vmatprep.mubr.f32.mxu0 0.0
        %405 = vmatmul.mubr.f32.gmra.mrb[0].mxu0 %v269
        %v406 = vpop.f32.mrb[0].mxu0
        %v407 = vadd.f32 %v229, %v406
        %v408 = vpop.f32.mrb[0].mxu0
        %409 = vmatprep.mubr.f32.mxu0 0.0
        %410 = vmatmul.mubr.f32.gmra.mrb[0].mxu0 %v272
        %v411 = vpop.f32.mrb[0].mxu0
        %v412 = vadd.f32 %v229, %v411
        %v413 = vpop.f32.mrb[0].mxu0
        %414 = vmatprep.mubr.f32.mxu0 0.0
        %415 = vmatmul.mubr.f32.gmra.mrb[0].mxu0 %v275
        %v416 = vpop.f32.mrb[0].mxu0
        %v417 = vadd.f32 %v229, %v416
        %v418 = vpop.f32.mrb[0].mxu0
        %419 = vmatprep.mubr.f32.mxu0 0.0
        %420 = vmatmul.mubr.f32.gmra.mrb[0].mxu0 %v278
        %v421 = vpop.f32.mrb[0].mxu0
        %v422 = vadd.f32 %v229, %v421
        %v423 = vpop.f32.mrb[0].mxu0
        %424 = vdwg.mxu0
        %vm425 = vcmp.ge.f32.partialorder %v347, 0.0
        %vm426 = vcmp.ge.f32.partialorder %v352, 0.0
        %vm427 = vcmp.ge.f32.partialorder %v357, 0.0
        %vm428 = vcmp.ge.f32.partialorder %v362, 0.0
        %vm429 = vcmp.ge.f32.partialorder %v367, 0.0
        %vm430 = vcmp.ge.f32.partialorder %v372, 0.0
        %vm431 = vcmp.ge.f32.partialorder %v377, 0.0
        %vm432 = vcmp.ge.f32.partialorder %v382, 0.0
        %vm433 = vcmp.ge.f32.partialorder %v387, 0.0
        %vm434 = vcmp.ge.f32.partialorder %v392, 0.0
        %vm435 = vcmp.ge.f32.partialorder %v397, 0.0
        %vm436 = vcmp.ge.f32.partialorder %v402, 0.0
        %vm437 = vcmp.ge.f32.partialorder %v407, 0.0
        %vm438 = vcmp.ge.f32.partialorder %v412, 0.0
        %vm439 = vcmp.ge.f32.partialorder %v417, 0.0
        %vm440 = vcmp.ge.f32.partialorder %v422, 0.0
        %v441 = vmul.f32 %v347, 0.01
        %v442 = vmul.f32 %v352, 0.01
        %v443 = vmul.f32 %v357, 0.01
        %v444 = vmul.f32 %v362, 0.01
        %v445 = vmul.f32 %v367, 0.01
        %v446 = vmul.f32 %v372, 0.01
        %v447 = vmul.f32 %v377, 0.01
        %v448 = vmul.f32 %v382, 0.01
        %v449 = vmul.f32 %v387, 0.01
        %v450 = vmul.f32 %v392, 0.01
        %v451 = vmul.f32 %v397, 0.01
        %v452 = vmul.f32 %v402, 0.01
        %v453 = vmul.f32 %v407, 0.01
        %v454 = vmul.f32 %v412, 0.01
        %v455 = vmul.f32 %v417, 0.01
        %v456 = vmul.f32 %v422, 0.01
        %v457 = vsel %vm425, %v347, %v441
        %v458 = vsel %vm426, %v352, %v442
        %v459 = vsel %vm427, %v357, %v443
        %v460 = vsel %vm428, %v362, %v444
        %v461 = vsel %vm429, %v367, %v445
        %v462 = vsel %vm430, %v372, %v446
        %v463 = vsel %vm431, %v377, %v447
        %v464 = vsel %vm432, %v382, %v448
        %v465 = vsel %vm433, %v387, %v449
        %v466 = vsel %vm434, %v392, %v450
        %v467 = vsel %vm435, %v397, %v451
        %v468 = vsel %vm436, %v402, %v452
        %v469 = vsel %vm437, %v407, %v453
        %v470 = vsel %vm438, %v412, %v454
        %v471 = vsel %vm439, %v417, %v455
        %v472 = vsel %vm440, %v422, %v456
        %473 = vst [vmem:[%s188] sm:$0xff] %v457
        %474 = vst [vmem:[%s188 + $0x8] sm:$0xff] %v458
        %475 = vst [vmem:[%s188 + $0x10] sm:$0xff] %v459
        %476 = vst [vmem:[%s188 + $0x18] sm:$0xff] %v460
        %477 = vst [vmem:[%s188 + $0x20] sm:$0xff] %v461
        %478 = vst [vmem:[%s188 + $0x28] sm:$0xff] %v462
        %479 = vst [vmem:[%s188 + $0x30] sm:$0xff] %v463
        %480 = vst [vmem:[%s188 + $0x38] sm:$0xff] %v464
        %481 = vst [vmem:[%s188 + $0x40] sm:$0xff] %v465
        %482 = vst [vmem:[%s188 + $0x48] sm:$0xff] %v466
        %483 = vst [vmem:[%s188 + $0x50] sm:$0xff] %v467
        %484 = vst [vmem:[%s188 + $0x58] sm:$0xff] %v468
        %485 = vst [vmem:[%s188 + $0x60] sm:$0xff] %v469
        %486 = vst [vmem:[%s188 + $0x68] sm:$0xff] %v470
        %487 = vst [vmem:[%s188 + $0x70] sm:$0xff] %v471
        %488 = vst [vmem:[%s188 + $0x78] sm:$0xff] %v472
        %s489 = sand.u32 %s109, 1
        %s490 = scalar_lea.sflag [#allocation3], %s489
        %s491 = sand.u32 %s109, 1
        %s492 = smul.addr %s491, 128
        %s493 = scalar_lea.vmem [#allocation2], %s492
        // Predicated region
        $region33: #{tpu_custom_call.1} parent=31 // pred_check
          %p494 = pneg %p119
        $region34: #{tpu_custom_call.1} parent=31 // pred_check_branch
          %496 = sbr.rel (%p494) target = $region36
        $region35: #{tpu_custom_call.1} parent=31 // pred_region
          %s497 = smul.u32 16, %s22
          %s499 = ssub.s32 2048, 2048
          %500 = vsyncadd %s490, %s499
          %s501 = smul.addr %s21, 16
          %s502 = sadd.s32 %s497, %s501
          %s503 = smul.addr %s502, 128
          %s504 = scalar_lea.hbm %s3, %s503
          %s505 = sshll.u32 %s493, 4
          %s506 = int_to_ptr.vmem [resolvable:$true] %s505
          %511 = dma.vmem_to_hbm [thread:$0]  %s506, 2048, %s504, %s490, 128, 128, 8
        $region36: #{tpu_custom_call.1} parent=31 // pred_fallthru
          _
      $region32: #{tpu_custom_call.1} parent=5 // pred_fallthru
        _
      %p512 = scmp.le.s32.totalorder 2, %s12
      // Predicated region
      $region37: #{tpu_custom_call.1} parent=5 // pred_check
        %p513 = pneg %p512
      $region38: #{tpu_custom_call.1} parent=5 // pred_check_branch
        %515 = sbr.rel (%p513) target = $region40
      $region39: #{tpu_custom_call.1} parent=5 // pred_region
        %s516 = ssub.s32 %s12, 2
        // Predicated region
        $region41: #{tpu_custom_call.1} parent=39 // pred_check
          %p517 = pneg %p125
        $region42: #{tpu_custom_call.1} parent=39 // pred_check_branch
          %519 = sbr.rel (%p517) target = $region44
        $region43: #{tpu_custom_call.1} parent=39 // pred_region
          %s520 = sand.u32 %s110, 1
          %s521 = scalar_lea.sflag [#allocation3], %s520
          %s522 = sand.u32 %s110, 1
          %s523 = smul.addr %s522, 128
          %s524 = scalar_lea.vmem [#allocation2], %s523
          %525 = dma.done %s521, 2048
        $region44: #{tpu_custom_call.1} parent=39 // pred_fallthru
          _
      $region40: #{tpu_custom_call.1} parent=5 // pred_fallthru
        _
    $region6: #{tpu_custom_call.1} parent=1 // loop_footer
      %s16 = sadd.s32 1, %s12
    $region7: #{tpu_custom_call.1} parent=1 // loop_footer_branch
      %11 = sbr.rel target = $region3
    $region8: #{tpu_custom_call.1} parent=1 // loop_exit
      _
    %526 = vsyncpa [#allocation3], 1
    %s527 = scalar_lea.sflag [#allocation3], 1
    %528 = vsyncpa %s527, 1

</llo_original>
